<compile_context>
chip_gen: v6e
topology: v6e:2x2x1
jax: 0.10.0
libtpu: 0.0.40
codegen_flags: <defaults>
</compile_context>

<pallas_src>
import functools

import jax
import jax.numpy as jnp
from jax.experimental import pallas as pl
from jax.experimental.pallas import tpu as pltpu


def _predictor_kernel(src_ref, dst_ref, ws_ref, wd_ref, p_ref, out_ref, *, eps):
    # src_ref : [tb, D]       source-node batch tile
    # dst_ref : [tb, D]       destination-node batch tile
    # ws_ref  : [D, hidden]   folded weight hitting src (Wv@Wo@W1a + W1b)
    # wd_ref  : [D, hidden]   folded weight hitting dst (W1c)
    # p_ref   : [8, hidden]   packed rows: 0=fused bias, 1=ln_gamma, 2=ln_beta,
    #                                      3=w2 row, 4=b2 (broadcast across the row)
    # Two MXU pushes (same FLOPs as a single K=2D matmul), f32 accumulation.
    h = jnp.dot(src_ref[...], ws_ref[...], preferred_element_type=jnp.float32)
    h = h + jnp.dot(dst_ref[...], wd_ref[...], preferred_element_type=jnp.float32)
    h = h + p_ref[0:1, :]

    # LayerNorm (biased variance, eps=1e-5) + ReLU; Dropout is identity in eval.
    mu = jnp.mean(h, axis=-1, keepdims=True)
    var = jnp.mean((h - mu) * (h - mu), axis=-1, keepdims=True)
    h = (h - mu) * jax.lax.rsqrt(var + eps) * p_ref[1:2, :] + p_ref[2:3, :]
    h = jnp.maximum(h, 0.0)

    # Final Linear(hidden -> 1) as a VPU/XLU reduction (no N=1 MXU matmul).
    out_ref[...] = jnp.sum(h * p_ref[3:4, :], axis=-1, keepdims=True) + p_ref[4:5, 0:1]


def fold_params(params, *, compute_dtype=jnp.bfloat16):
    """Fold the attention linears into scoring layer 0.  Pure parameter algebra: compute
    once per parameter set and reuse across calls."""
    f32 = jnp.float32
    D = params["wv"].shape[0]
    hidden = params["w1"].shape[1]

    w1 = params["w1"].astype(f32)
    w1a, w1b, w1c = w1[:D], w1[D:2 * D], w1[2 * D:]
    wvo = params["wv"].astype(f32) @ params["wo"].astype(f32)                  # Wv @ Wo
    w_src = wvo @ w1a + w1b                                                    # [D, hidden]
    w_dst = w1c                                                                # [D, hidden]
    c = (params["bv"].astype(f32) @ params["wo"].astype(f32)
         + params["bo"].astype(f32)) @ w1a + params["b1"].astype(f32)          # [1, hidden]

    # Pack all tiny per-feature params into one [8, hidden] array (one replicated DMA).
    packed = jnp.zeros((8, hidden), f32)
    packed = packed.at[0].set(c[0])
    packed = packed.at[1].set(params["ln_g"].reshape(-1).astype(f32))
    packed = packed.at[2].set(params["ln_b"].reshape(-1).astype(f32))
    packed = packed.at[3].set(params["w2"].reshape(-1).astype(f32))
    packed = packed.at[4].set(params["b2"].reshape(())[()].astype(f32))        # broadcast row

    return {
        "w_src": w_src.astype(compute_dtype),
        "w_dst": w_dst.astype(compute_dtype),
        "packed": packed,                      # LN/bias/reduce params stay f32
    }


def _pick_tile(batch, sub, cap=1024):
    """Row-tile size: as big as possible (<= cap) to amortize per-step overhead; the tile
    count is rounded up to an even number when >1 so v7x's two TensorCores split evenly."""
    n = pl.cdiv(batch, cap)
    if n > 1:
        n = 2 * pl.cdiv(n, 2)
    return sub * pl.cdiv(pl.cdiv(batch, n), sub)


def attention_predictor_apply(src, dst, folded, *, tb=None):
    """Run the folded predictor.  src/dst: [B, D] node embeddings; folded: fold_params(...)."""
    B, D = src.shape
    w_src, w_dst, packed = folded["w_src"], folded["w_dst"], folded["packed"]
    hidden = w_src.shape[1]
    compute_dtype = w_src.dtype
    itemsize = jnp.dtype(compute_dtype).itemsize
    sub = {4: 8, 2: 16, 1: 32}[itemsize]       # sublane granularity per element width

    if tb is None:
        tb = _pick_tile(B, sub)
    else:
        tb = sub * pl.cdiv(tb, sub)
    n_tiles = pl.cdiv(B, tb)                   # ragged last block: OOB rows masked on store

    src = src.astype(compute_dtype)
    dst = dst.astype(compute_dtype)

    # VMEM budget: double-buffered src/dst tiles + resident folded weights + packed params.
    # TODO(synk): for very large D*hidden (weight > ~24 MiB on v7x's 64 MiB VMEM) add a
    # hidden-dim grid axis with a two-pass LayerNorm instead of keeping W resident.
    vmem_est = (2 * 2 * tb * D * itemsize            # src/dst tiles, double-buffered
                + 2 * 2 * D * hidden * itemsize      # w_src/w_dst replicated blocks
                + 2 * 8 * hidden * 4                 # packed params
                + 2 * tb * 4)                        # output tiles
    vmem_limit = int(min(64 * 2 ** 20, max(16 * 2 ** 20, 2 * vmem_est)))

    rep = lambda shape: pl.BlockSpec(shape, lambda i: (0, 0))  # constant block: fetched once

    out = pl.pallas_call(
        functools.partial(_predictor_kernel, eps=1e-5),
        out_shape=jax.ShapeDtypeStruct((B, 1), jnp.float32),
        grid_spec=pltpu.PrefetchScalarGridSpec(
            num_scalar_prefetch=0,
            grid=(n_tiles,),
            in_specs=[
                pl.BlockSpec((tb, D), lambda i: (i, 0)),   # src batch tile
                pl.BlockSpec((tb, D), lambda i: (i, 0)),   # dst batch tile
                rep((D, hidden)),                          # folded src weight
                rep((D, hidden)),                          # folded dst weight
                rep((8, hidden)),                          # packed small params
            ],
            out_specs=pl.BlockSpec((tb, 1), lambda i: (i, 0)),
        ),
        compiler_params=pltpu.CompilerParams(
            dimension_semantics=("parallel",),
            vmem_limit_bytes=vmem_limit),
    )(src, dst, w_src, w_dst, packed)
    return out


def enhanced_attention_predictor(src, dst, params, *, num_heads, tb=None,
                                 compute_dtype=jnp.bfloat16):
    """EnhancedAttentionPredictor.forward (eval).  num_heads kept for API parity; the
    singleton-key softmax makes the Q/K heads mathematically irrelevant after folding."""
    del num_heads
    folded = fold_params(params, compute_dtype=compute_dtype)
    return attention_predictor_apply(src, dst, folded, tb=tb)


def _reference(src, dst, params, *, num_heads):
    """Pure-JAX mirror of the original (unfused) PyTorch forward, eval mode."""
    B, D = src.shape
    hd = D // num_heads
    scale = float(hd) ** -0.5
    q = dst @ params["wq"] + params["bq"][0]
    k = src @ params["wk"] + params["bk"][0]
    v = src @ params["wv"] + params["bv"][0]
    qh = q.reshape(B, num_heads, hd)
    kh = k.reshape(B, num_heads, hd)
    vh = v.reshape(B, num_heads, hd)
    s = jnp.sum(qh * kh, axis=-1, keepdims=True) * scale       # [B, H, 1]
    w = jax.nn.softmax(s, axis=-1)                             # singleton -> ones
    attn = (w * vh).reshape(B, D)
    attn_out = attn @ params["wo"] + params["bo"][0]
    combined = jnp.concatenate([attn_out, src, dst], axis=1)
    h = combined @ params["w1"] + params["b1"][0]
    mu = jnp.mean(h, axis=-1, keepdims=True)
    var = jnp.mean((h - mu) ** 2, axis=-1, keepdims=True)
    h = (h - mu) / jnp.sqrt(var + 1e-5) * params["ln_g"][0] + params["ln_b"][0]
    h = jnp.maximum(h, 0.0)
    return h @ params["w2"] + params["b2"][0]


if __name__ == "__main__":
    B, D, hidden, heads = 16, 32, 32, 4

    key = jax.random.PRNGKey(0)
    ks = jax.random.split(key, 16)
    init = lambda k, shape, fan_in: jax.random.uniform(
        k, shape, jnp.float32, -1.0 / (fan_in ** 0.5), 1.0 / (fan_in ** 0.5))

    params = {
        "wq": init(ks[0], (D, D), D), "bq": init(ks[1], (1, D), D),
        "wk": init(ks[2], (D, D), D), "bk": init(ks[3], (1, D), D),
        "wv": init(ks[4], (D, D), D), "bv": init(ks[5], (1, D), D),
        "wo": init(ks[6], (D, D), D), "bo": init(ks[7], (1, D), D),
        "w1": init(ks[8], (3 * D, hidden), 3 * D), "b1": init(ks[9], (1, hidden), 3 * D),
        "ln_g": jnp.ones((1, hidden), jnp.float32),
        "ln_b": jnp.zeros((1, hidden), jnp.float32),
        "w2": init(ks[10], (hidden, 1), hidden), "b2": init(ks[11], (1, 1), hidden),
    }

    src = jax.random.normal(ks[12], (B, D), jnp.float32)
    dst = jax.random.normal(ks[13], (B, D), jnp.float32)

    ref = _reference(src, dst, params, num_heads=heads)

    # --- f32 path: tight tolerance -----------------------------------------------------
    folded_f32 = fold_params(params, compute_dtype=jnp.float32)   # fold once, reuse
    out_f32 = jax.block_until_ready(attention_predictor_apply(src, dst, folded_f32))
    assert out_f32.shape == (B, 1)
    assert jnp.allclose(out_f32, ref, rtol=1e-4, atol=1e-4), (out_f32, ref)

    # Non-multiple-of-tile batch (exercises the ragged last block / masked store path).
    Bo = 13
    out_f32_tail = jax.block_until_ready(
        attention_predictor_apply(src[:Bo], dst[:Bo], folded_f32))
    assert out_f32_tail.shape == (Bo, 1)
    assert jnp.allclose(out_f32_tail, ref[:Bo], rtol=1e-4, atol=1e-4), (out_f32_tail, ref[:Bo])

    # --- default bf16 activation/weight stream: looser tolerance ------------------------
    out_bf16 = jax.block_until_ready(
        enhanced_attention_predictor(src, dst, params, num_heads=heads))
    assert out_bf16.shape == (B, 1)
    assert jnp.allclose(out_bf16, ref, rtol=1e-1, atol=1e-1), (out_bf16, ref)

    out_bf16_tail = jax.block_until_ready(
        enhanced_attention_predictor(src[:Bo], dst[:Bo], params, num_heads=heads))
    assert out_bf16_tail.shape == (Bo, 1)
    assert jnp.allclose(out_bf16_tail, ref[:Bo], rtol=1e-1, atol=1e-1), (out_bf16_tail, ref[:Bo])

    print("KERNEL_OK")
</pallas_src>

<mosaic_0001>
module attributes {stable_mosaic.version = 11 : i64} {
  func.func @_predictor_kernel(%arg0: i32, %arg1: memref<16x32xf32, #tpu.memory_space<vmem>>, %arg2: memref<16x32xf32, #tpu.memory_space<vmem>>, %arg3: memref<32x32xf32, #tpu.memory_space<vmem>>, %arg4: memref<32x32xf32, #tpu.memory_space<vmem>>, %arg5: memref<8x32xf32, #tpu.memory_space<vmem>>, %arg6: memref<16x1xf32, #tpu.memory_space<vmem>>) attributes {dimension_semantics = [#tpu.dimension_semantics<parallel>], iteration_bounds = array<i64: 1>, scalar_prefetch = 0 : i64, scratch_operands = 0 : i64, tpu.core_type = #tpu.core_type<tc>, window_params = [{transform_indices = @transform_0, window_bounds = array<i64: 16, 32>}, {transform_indices = @transform_1, window_bounds = array<i64: 16, 32>}, {pipeline_mode = #tpu.pipeline_mode<synchronous>, transform_indices = @transform_2, window_bounds = array<i64: 32, 32>}, {pipeline_mode = #tpu.pipeline_mode<synchronous>, transform_indices = @transform_3, window_bounds = array<i64: 32, 32>}, {pipeline_mode = #tpu.pipeline_mode<synchronous>, transform_indices = @transform_4, window_bounds = array<i64: 8, 32>}, {transform_indices = @transform_5, window_bounds = array<i64: 16, 1>}]} {
    %c0 = arith.constant 0 : index
    %c0_0 = arith.constant 0 : index
    %0 = vector.load %arg1[%c0, %c0_0] : memref<16x32xf32, #tpu.memory_space<vmem>>, vector<16x32xf32>
    %c0_1 = arith.constant 0 : index
    %c0_2 = arith.constant 0 : index
    %1 = vector.load %arg3[%c0_1, %c0_2] : memref<32x32xf32, #tpu.memory_space<vmem>>, vector<32x32xf32>
    %cst = arith.constant dense<0.000000e+00> : vector<16x32xf32>
    %2 = tpu.matmul %0, %1, %cst {dimension_numbers = #tpu.dot_dimension_numbers<[1], [0], [0], [1], [0, 0, 1, 1], [], []>} : vector<16x32xf32>, vector<32x32xf32>, vector<16x32xf32> -> vector<16x32xf32>
    %c0_3 = arith.constant 0 : index
    %c0_4 = arith.constant 0 : index
    %3 = vector.load %arg2[%c0_3, %c0_4] : memref<16x32xf32, #tpu.memory_space<vmem>>, vector<16x32xf32>
    %c0_5 = arith.constant 0 : index
    %c0_6 = arith.constant 0 : index
    %4 = vector.load %arg4[%c0_5, %c0_6] : memref<32x32xf32, #tpu.memory_space<vmem>>, vector<32x32xf32>
    %cst_7 = arith.constant dense<0.000000e+00> : vector<16x32xf32>
    %5 = tpu.matmul %3, %4, %cst_7 {dimension_numbers = #tpu.dot_dimension_numbers<[1], [0], [0], [1], [0, 0, 1, 1], [], []>} : vector<16x32xf32>, vector<32x32xf32>, vector<16x32xf32> -> vector<16x32xf32>
    %6 = arith.addf %2, %5 : vector<16x32xf32>
    %c0_8 = arith.constant 0 : index
    %c0_9 = arith.constant 0 : index
    %7 = vector.load %arg5[%c0_8, %c0_9] : memref<8x32xf32, #tpu.memory_space<vmem>>, vector<1x32xf32>
    %8 = vector.broadcast %7 : vector<1x32xf32> to vector<16x32xf32>
    %9 = arith.addf %6, %8 : vector<16x32xf32>
    %cst_10 = arith.constant dense<0.000000e+00> : vector<16xf32>
    %10 = vector.multi_reduction <add>, %9, %cst_10 [1] : vector<16x32xf32> to vector<16xf32>
    %11 = vector.shape_cast %10 : vector<16xf32> to vector<16x1xf32>
    %cst_11 = arith.constant 3.200000e+01 : f32
    %12 = vector.broadcast %cst_11 : f32 to vector<16x1xf32>
    %13 = arith.divf %11, %12 : vector<16x1xf32>
    %14 = vector.broadcast %13 : vector<16x1xf32> to vector<16x32xf32>
    %15 = arith.subf %9, %14 : vector<16x32xf32>
    %16 = vector.broadcast %13 : vector<16x1xf32> to vector<16x32xf32>
    %17 = arith.subf %9, %16 : vector<16x32xf32>
    %18 = arith.mulf %15, %17 : vector<16x32xf32>
    %cst_12 = arith.constant dense<0.000000e+00> : vector<16xf32>
    %19 = vector.multi_reduction <add>, %18, %cst_12 [1] : vector<16x32xf32> to vector<16xf32>
    %20 = vector.shape_cast %19 : vector<16xf32> to vector<16x1xf32>
    %cst_13 = arith.constant 3.200000e+01 : f32
    %21 = vector.broadcast %cst_13 : f32 to vector<16x1xf32>
    %22 = arith.divf %20, %21 : vector<16x1xf32>
    %23 = vector.broadcast %13 : vector<16x1xf32> to vector<16x32xf32>
    %24 = arith.subf %9, %23 : vector<16x32xf32>
    %cst_14 = arith.constant 9.99999974E-6 : f32
    %25 = vector.broadcast %cst_14 : f32 to vector<16x1xf32>
    %26 = arith.addf %22, %25 : vector<16x1xf32>
    %27 = math.rsqrt %26 : vector<16x1xf32>
    %28 = vector.broadcast %27 : vector<16x1xf32> to vector<16x32xf32>
    %29 = arith.mulf %24, %28 : vector<16x32xf32>
    %c1 = arith.constant 1 : index
    %c0_15 = arith.constant 0 : index
    %30 = vector.load %arg5[%c1, %c0_15] : memref<8x32xf32, #tpu.memory_space<vmem>>, vector<1x32xf32>
    %31 = vector.broadcast %30 : vector<1x32xf32> to vector<16x32xf32>
    %32 = arith.mulf %29, %31 : vector<16x32xf32>
    %c2 = arith.constant 2 : index
    %c0_16 = arith.constant 0 : index
    %33 = vector.load %arg5[%c2, %c0_16] : memref<8x32xf32, #tpu.memory_space<vmem>>, vector<1x32xf32>
    %34 = vector.broadcast %33 : vector<1x32xf32> to vector<16x32xf32>
    %35 = arith.addf %32, %34 : vector<16x32xf32>
    %cst_17 = arith.constant 0.000000e+00 : f32
    %36 = vector.broadcast %cst_17 : f32 to vector<16x32xf32>
    %37 = arith.maximumf %35, %36 : vector<16x32xf32>
    %c3 = arith.constant 3 : index
    %c0_18 = arith.constant 0 : index
    %38 = vector.load %arg5[%c3, %c0_18] : memref<8x32xf32, #tpu.memory_space<vmem>>, vector<1x32xf32>
    %39 = vector.broadcast %38 : vector<1x32xf32> to vector<16x32xf32>
    %40 = arith.mulf %37, %39 : vector<16x32xf32>
    %cst_19 = arith.constant dense<0.000000e+00> : vector<16xf32>
    %41 = vector.multi_reduction <add>, %40, %cst_19 [1] : vector<16x32xf32> to vector<16xf32>
    %42 = vector.shape_cast %41 : vector<16xf32> to vector<16x1xf32>
    %c4 = arith.constant 4 : index
    %c0_20 = arith.constant 0 : index
    %43 = vector.load %arg5[%c4, %c0_20] : memref<8x32xf32, #tpu.memory_space<vmem>>, vector<1x1xf32>
    %44 = vector.broadcast %43 : vector<1x1xf32> to vector<16x1xf32>
    %45 = arith.addf %42, %44 : vector<16x1xf32>
    %c0_21 = arith.constant 0 : index
    %c0_22 = arith.constant 0 : index
    %46 = vector.load %arg6[%c0_21, %c0_22] : memref<16x1xf32, #tpu.memory_space<vmem>>, vector<16x1xf32>
    tpu.vector_store %arg6[%c0_21, %c0_22], %45 {strides = array<i32>} : memref<16x1xf32, #tpu.memory_space<vmem>>, vector<16x1xf32>,
    return
  }
  func.func @transform_0(%arg0: i32) -> (i32, i32) {
    %c0_i32 = arith.constant 0 : i32
    %c0_i32_0 = arith.constant 0 : i32
    return %arg0, %c0_i32 : i32, i32
  }
  func.func @transform_1(%arg0: i32) -> (i32, i32) {
    %c0_i32 = arith.constant 0 : i32
    %c0_i32_0 = arith.constant 0 : i32
    return %arg0, %c0_i32 : i32, i32
  }
  func.func @transform_2(%arg0: i32) -> (i32, i32) {
    %c0_i32 = arith.constant 0 : i32
    %c0_i32_0 = arith.constant 0 : i32
    %c0_i32_1 = arith.constant 0 : i32
    return %c0_i32, %c0_i32_0 : i32, i32
  }
  func.func @transform_3(%arg0: i32) -> (i32, i32) {
    %c0_i32 = arith.constant 0 : i32
    %c0_i32_0 = arith.constant 0 : i32
    %c0_i32_1 = arith.constant 0 : i32
    return %c0_i32, %c0_i32_0 : i32, i32
  }
  func.func @transform_4(%arg0: i32) -> (i32, i32) {
    %c0_i32 = arith.constant 0 : i32
    %c0_i32_0 = arith.constant 0 : i32
    %c0_i32_1 = arith.constant 0 : i32
    return %c0_i32, %c0_i32_0 : i32, i32
  }
  func.func @transform_5(%arg0: i32) -> (i32, i32) {
    %c0_i32 = arith.constant 0 : i32
    %c0_i32_0 = arith.constant 0 : i32
    return %arg0, %c0_i32 : i32, i32
  }
}

</mosaic_0001>

<llo_original>
// kernel: tpu_custom_call.1
$region0: #{tpu_custom_call.1}
  #allocation0 [shape = 'u32[]', space=smem, size = 0x4, offset = 0x4, fixed_abs, tag = 'smem constant byte address 0x4 - core index']
  #allocation1 [shape = 'u32[144,128]{1,0:T(1,128)}', space=vmem, size = 0x12000, scoped, tag = 'internal scratch']
  %s0 = inlined_call_operand.hbm [shape: f32[16,32], index: 0, kind: input, shape index: {}]
  %s1 = inlined_call_operand.hbm [shape: f32[16,32], index: 1, kind: input, shape index: {}]
  %s2 = inlined_call_operand.hbm [shape: f32[32,32], index: 2, kind: input, shape index: {}]
  %s3 = inlined_call_operand.hbm [shape: f32[32,32], index: 3, kind: input, shape index: {}]
  %s4 = inlined_call_operand.hbm [shape: f32[8,32], index: 4, kind: input, shape index: {}]
  %s5 = inlined_call_operand.vmem [shape: f32[16,1], index: 5, kind: output, shape index: {}]
  %s6 = sld [smem:[#allocation0]]
  $region50: #{tpu_custom_call.1} parent=0
    _
  %s8 = ssub.s32 1, %s6
  %s9 = scalar_select 0, %s8, %s6
  $region1: #{tpu_custom_call.1} parent=0
    #allocation2 [shape = 'u8[8192]{0}', space=vmem, size = 0x2000, scoped, tag = 'input window, operand 0, single buffered']
    #allocation3 [shape = 's32[1]{0}', space=sflag, size = 0x4, scoped, tag = 'scoped memory for tpu_custom_call.1']
    #allocation4 [shape = 'u8[8192]{0}', space=vmem, size = 0x2000, scoped, tag = 'input window, operand 1, single buffered']
    #allocation5 [shape = 's32[1]{0}', space=sflag, size = 0x4, scoped, tag = 'scoped memory for tpu_custom_call.1']
    #allocation6 [shape = 'u8[16384]{0}', space=vmem, size = 0x4000, scoped, tag = 'input window, operand 2, single buffered']
    #allocation7 [shape = 'u8[16384]{0}', space=vmem, size = 0x4000, scoped, tag = 'input window, operand 3, single buffered']
    #allocation8 [shape = 's32[1]{0}', space=sflag, size = 0x4, scoped, tag = 'scoped memory for tpu_custom_call.1']
    #allocation9 [shape = 'u8[4096]{0}', space=vmem, size = 0x1000, scoped, tag = 'input window, operand 4, single buffered']
    %10 = vsyncpa [#allocation3], 0
    %11 = vsyncpa [#allocation5], 0
    %12 = vsyncpa [#allocation8], 0
    // Predicated region
    $region2: #{tpu_custom_call.1} parent=1 // pred_check
      _
    $region3: #{tpu_custom_call.1} parent=1 // pred_check_branch
      %14 = sbr.rel (0) target = $region5
    $region4: #{tpu_custom_call.1} parent=1 // pred_region
      %s16 = ssub.s32 256, 256
      %17 = vsyncadd [#allocation3], %s16
      %s18 = sshll.u32 [#allocation2], 4
      %s19 = int_to_ptr.vmem [resolvable:$true] %s18
      %24 = dma.hbm_to_vmem [thread:$0]  %s0, 256, %s19, [#allocation3], 128, 128, 8
    $region5: #{tpu_custom_call.1} parent=1 // pred_fallthru
      _
    // Predicated region
    $region6: #{tpu_custom_call.1} parent=1 // pred_check
      _
    $region7: #{tpu_custom_call.1} parent=1 // pred_check_branch
      %26 = sbr.rel (0) target = $region9
    $region8: #{tpu_custom_call.1} parent=1 // pred_region
      %s28 = ssub.s32 256, 256
      %29 = vsyncadd [#allocation5], %s28
      %s30 = sshll.u32 [#allocation4], 4
      %s31 = int_to_ptr.vmem [resolvable:$true] %s30
      %36 = dma.hbm_to_vmem [thread:$0]  %s1, 256, %s31, [#allocation5], 128, 128, 8
    $region9: #{tpu_custom_call.1} parent=1 // pred_fallthru
      _
    // Predicated region
    $region10: #{tpu_custom_call.1} parent=1 // pred_check
      _
    $region11: #{tpu_custom_call.1} parent=1 // pred_check_branch
      %38 = sbr.rel (0) target = $region13
    $region12: #{tpu_custom_call.1} parent=1 // pred_region
      %s40 = ssub.s32 512, 512
      %41 = vsyncadd [#allocation5], %s40
      %s42 = sshll.u32 [#allocation6], 4
      %s43 = int_to_ptr.vmem [resolvable:$true] %s42
      %48 = dma.hbm_to_vmem [thread:$0]  %s2, 512, %s43, [#allocation5], 128, 128, 8
    $region13: #{tpu_custom_call.1} parent=1 // pred_fallthru
      _
    // Predicated region
    $region14: #{tpu_custom_call.1} parent=1 // pred_check
      _
    $region15: #{tpu_custom_call.1} parent=1 // pred_check_branch
      %50 = sbr.rel (0) target = $region17
    $region16: #{tpu_custom_call.1} parent=1 // pred_region
      %s52 = ssub.s32 512, 512
      %53 = vsyncadd [#allocation8], %s52
      %s54 = sshll.u32 [#allocation7], 4
      %s55 = int_to_ptr.vmem [resolvable:$true] %s54
      %60 = dma.hbm_to_vmem [thread:$0]  %s3, 512, %s55, [#allocation8], 128, 128, 8
    $region17: #{tpu_custom_call.1} parent=1 // pred_fallthru
      _
    // Predicated region
    $region18: #{tpu_custom_call.1} parent=1 // pred_check
      _
    $region19: #{tpu_custom_call.1} parent=1 // pred_check_branch
      %62 = sbr.rel (0) target = $region21
    $region20: #{tpu_custom_call.1} parent=1 // pred_region
      %s64 = ssub.s32 128, 128
      %65 = vsyncadd [#allocation8], %s64
      %s67 = sshll.u32 [#allocation9], 4
      %s68 = int_to_ptr.vmem [resolvable:$true] %s67
      %70 = dma.hbm_to_vmem [thread:$0]  %s4, 128, %s68, [#allocation8]
    $region21: #{tpu_custom_call.1} parent=1 // pred_fallthru
      _
    // Predicated region
    $region22: #{tpu_custom_call.1} parent=1 // pred_check
      _
    $region23: #{tpu_custom_call.1} parent=1 // pred_check_branch
      %72 = sbr.rel (0) target = $region25
    $region24: #{tpu_custom_call.1} parent=1 // pred_region
      %73 = dma.done [#allocation3], 256
    $region25: #{tpu_custom_call.1} parent=1 // pred_fallthru
      _
    // Predicated region
    $region26: #{tpu_custom_call.1} parent=1 // pred_check
      _
    $region27: #{tpu_custom_call.1} parent=1 // pred_check_branch
      %75 = sbr.rel (0) target = $region29
    $region28: #{tpu_custom_call.1} parent=1 // pred_region
      %76 = dma.done [#allocation5], 256
    $region29: #{tpu_custom_call.1} parent=1 // pred_fallthru
      _
    // Predicated region
    $region30: #{tpu_custom_call.1} parent=1 // pred_check
      _
    $region31: #{tpu_custom_call.1} parent=1 // pred_check_branch
      %78 = sbr.rel (0) target = $region33
    $region32: #{tpu_custom_call.1} parent=1 // pred_region
      %79 = dma.done [#allocation5], 512
    $region33: #{tpu_custom_call.1} parent=1 // pred_fallthru
      _
    // Predicated region
    $region34: #{tpu_custom_call.1} parent=1 // pred_check
      _
    $region35: #{tpu_custom_call.1} parent=1 // pred_check_branch
      %81 = sbr.rel (0) target = $region37
    $region36: #{tpu_custom_call.1} parent=1 // pred_region
      %82 = dma.done [#allocation8], 512
    $region37: #{tpu_custom_call.1} parent=1 // pred_fallthru
      _
    // Predicated region
    $region38: #{tpu_custom_call.1} parent=1 // pred_check
      _
    $region39: #{tpu_custom_call.1} parent=1 // pred_check_branch
      %84 = sbr.rel (0) target = $region41
    $region40: #{tpu_custom_call.1} parent=1 // pred_region
      %85 = dma.done [#allocation8], 128
    $region41: #{tpu_custom_call.1} parent=1 // pred_fallthru
      _
    %v86 = vld [vmem:[#allocation2] sm:$0xff]
    %v87 = vld [vmem:[#allocation2 + $0x8] sm:$0xff]
    %v88 = vld [vmem:[#allocation6] sm:$0xff]
    %v89 = vld [vmem:[#allocation6 + $0x8] sm:$0xff]
    %v90 = vld [vmem:[#allocation6 + $0x10] sm:$0xff]
    %v91 = vld [vmem:[#allocation6 + $0x18] sm:$0xff]
    %v92 = vld [vmem:[#allocation4] sm:$0xff]
    %v93 = vld [vmem:[#allocation4 + $0x8] sm:$0xff]
    %v94 = vld [vmem:[#allocation7] sm:$0xff]
    %v95 = vld [vmem:[#allocation7 + $0x8] sm:$0xff]
    %v96 = vld [vmem:[#allocation7 + $0x10] sm:$0xff]
    %v97 = vld [vmem:[#allocation7 + $0x18] sm:$0xff]
    %vm98 = vcmask 261120
    %v100 = vsel %vm98, %v92, 0
    %v103 = vsel %vm98, %v93, 0
    %105 = vmatprep.subr.mxu0 0.0
    %106 = vmatpush1.msra.mxu0 0.0
    %107 = vmatprep.subr.mxu0 0.0
    %108 = vmatpush1.msra.mxu0 0.0
    %109 = vmatprep.subr.mxu0 0.0
    %110 = vmatpush1.msra.mxu0 0.0
    %111 = vmatprep.subr.mxu0 0.0
    %112 = vmatpush1.msra.mxu0 0.0
    %113 = vmatprep.subr.mxu0 0.0
    %114 = vmatpush1.msra.mxu0 0.0
    %115 = vmatprep.subr.mxu0 0.0
    %116 = vmatpush1.msra.mxu0 0.0
    %117 = vmatprep.subr.mxu0 0.0
    %118 = vmatpush1.msra.mxu0 0.0
    %119 = vmatprep.subr.mxu0 0.0
    %120 = vmatpush1.msra.mxu0 0.0
    %121 = vmatprep.subr.mxu0 0.0
    %122 = vmatpush1.msra.mxu0 0.0
    %123 = vmatprep.subr.mxu0 0.0
    %124 = vmatpush1.msra.mxu0 0.0
    %125 = vmatprep.subr.mxu0 0.0
    %126 = vmatpush1.msra.mxu0 0.0
    %127 = vmatprep.subr.mxu0 0.0
    %128 = vmatpush1.msra.mxu0 0.0
    %129 = vmatprep.subr.mxu0 0.0
    %130 = vmatpush1.msra.mxu0 %v97
    %131 = vmatprep.subr.mxu0 0.0
    %132 = vmatpush1.msra.mxu0 %v96
    %133 = vmatprep.subr.mxu0 0.0
    %134 = vmatpush1.msra.mxu0 %v95
    %135 = vmatprep.subr.mxu0 0.0
    %136 = vmatpush1.msra.mxu0 %v94
    %137 = vmatprep.subr.mxu0 0.0
    %138 = vmatpush2.msra.mxu0 0.0
    %139 = vmatprep.subr.mxu0 0.0
    %140 = vmatpush2.msra.mxu0 0.0
    %141 = vmatprep.subr.mxu0 0.0
    %142 = vmatpush2.msra.mxu0 0.0
    %143 = vmatprep.subr.mxu0 0.0
    %144 = vmatpush2.msra.mxu0 0.0
    %145 = vmatprep.subr.mxu0 0.0
    %146 = vmatpush2.msra.mxu0 0.0
    %147 = vmatprep.subr.mxu0 0.0
    %148 = vmatpush2.msra.mxu0 0.0
    %149 = vmatprep.subr.mxu0 0.0
    %150 = vmatpush2.msra.mxu0 0.0
    %151 = vmatprep.subr.mxu0 0.0
    %152 = vmatpush2.msra.mxu0 0.0
    %153 = vmatprep.subr.mxu0 0.0
    %154 = vmatpush2.msra.mxu0 0.0
    %155 = vmatprep.subr.mxu0 0.0
    %156 = vmatpush2.msra.mxu0 0.0
    %157 = vmatprep.subr.mxu0 0.0
    %158 = vmatpush2.msra.mxu0 0.0
    %159 = vmatprep.subr.mxu0 0.0
    %160 = vmatpush2.msra.mxu0 0.0
    %161 = vmatprep.subr.mxu0 0.0
    %162 = vmatpush2.msra.mxu0 0.0
    %163 = vmatprep.subr.mxu0 0.0
    %164 = vmatpush2.msra.mxu0 0.0
    %165 = vmatprep.subr.mxu0 0.0
    %166 = vmatpush2.msra.mxu0 0.0
    %167 = vmatprep.subr.mxu0 0.0
    %168 = vmatpush2.msra.mxu0 0.0
    %169 = vmatprep.mubr.f32.mxu0 0.0
    %170 = vmatmul.mubr.f32.gmra.mxu0 %v100
    %v171 = vpop.f32.mrf.mxu0
    %v172 = vadd.f32 0.0, %v171
    %v173 = vpop.f32.mrf.mxu0
    %174 = vmatprep.mubr.f32.mxu0 0.0
    %175 = vmatmul.mubr.f32.gmra.mxu0 %v103
    %v176 = vpop.f32.mrf.mxu0
    %v177 = vadd.f32 0.0, %v176
    %v178 = vpop.f32.mrf.mxu0
    %179 = vdwg.mxu0
    %v181 = vsel %vm98, %v86, 0
    %v184 = vsel %vm98, %v87, 0
    %186 = vmatprep.subr.mxu0 0.0
    %187 = vmatpush1.msra.mxu0 0.0
    %188 = vmatprep.subr.mxu0 0.0
    %189 = vmatpush1.msra.mxu0 0.0
    %190 = vmatprep.subr.mxu0 0.0
    %191 = vmatpush1.msra.mxu0 0.0
    %192 = vmatprep.subr.mxu0 0.0
    %193 = vmatpush1.msra.mxu0 0.0
    %194 = vmatprep.subr.mxu0 0.0
    %195 = vmatpush1.msra.mxu0 0.0
    %196 = vmatprep.subr.mxu0 0.0
    %197 = vmatpush1.msra.mxu0 0.0
    %198 = vmatprep.subr.mxu0 0.0
    %199 = vmatpush1.msra.mxu0 0.0
    %200 = vmatprep.subr.mxu0 0.0
    %201 = vmatpush1.msra.mxu0 0.0
    %202 = vmatprep.subr.mxu0 0.0
    %203 = vmatpush1.msra.mxu0 0.0
    %204 = vmatprep.subr.mxu0 0.0
    %205 = vmatpush1.msra.mxu0 0.0
    %206 = vmatprep.subr.mxu0 0.0
    %207 = vmatpush1.msra.mxu0 0.0
    %208 = vmatprep.subr.mxu0 0.0
    %209 = vmatpush1.msra.mxu0 0.0
    %210 = vmatprep.subr.mxu0 0.0
    %211 = vmatpush1.msra.mxu0 %v91
    %212 = vmatprep.subr.mxu0 0.0
    %213 = vmatpush1.msra.mxu0 %v90
    %214 = vmatprep.subr.mxu0 0.0
    %215 = vmatpush1.msra.mxu0 %v89
    %216 = vmatprep.subr.mxu0 0.0
    %217 = vmatpush1.msra.mxu0 %v88
    %218 = vmatprep.subr.mxu0 0.0
    %219 = vmatpush2.msra.mxu0 0.0
    %220 = vmatprep.subr.mxu0 0.0
    %221 = vmatpush2.msra.mxu0 0.0
    %222 = vmatprep.subr.mxu0 0.0
    %223 = vmatpush2.msra.mxu0 0.0
    %224 = vmatprep.subr.mxu0 0.0
    %225 = vmatpush2.msra.mxu0 0.0
    %226 = vmatprep.subr.mxu0 0.0
    %227 = vmatpush2.msra.mxu0 0.0
    %228 = vmatprep.subr.mxu0 0.0
    %229 = vmatpush2.msra.mxu0 0.0
    %230 = vmatprep.subr.mxu0 0.0
    %231 = vmatpush2.msra.mxu0 0.0
    %232 = vmatprep.subr.mxu0 0.0
    %233 = vmatpush2.msra.mxu0 0.0
    %234 = vmatprep.subr.mxu0 0.0
    %235 = vmatpush2.msra.mxu0 0.0
    %236 = vmatprep.subr.mxu0 0.0
    %237 = vmatpush2.msra.mxu0 0.0
    %238 = vmatprep.subr.mxu0 0.0
    %239 = vmatpush2.msra.mxu0 0.0
    %240 = vmatprep.subr.mxu0 0.0
    %241 = vmatpush2.msra.mxu0 0.0
    %242 = vmatprep.subr.mxu0 0.0
    %243 = vmatpush2.msra.mxu0 0.0
    %244 = vmatprep.subr.mxu0 0.0
    %245 = vmatpush2.msra.mxu0 0.0
    %246 = vmatprep.subr.mxu0 0.0
    %247 = vmatpush2.msra.mxu0 0.0
    %248 = vmatprep.subr.mxu0 0.0
    %249 = vmatpush2.msra.mxu0 0.0
    %250 = vmatprep.mubr.f32.mxu0 0.0
    %251 = vmatmul.mubr.f32.gmra.mxu0 %v181
    %v252 = vpop.f32.mrf.mxu0
    %v253 = vadd.f32 %v172, %v252
    %v254 = vpop.f32.mrf.mxu0
    %255 = vmatprep.mubr.f32.mxu0 0.0
    %256 = vmatmul.mubr.f32.gmra.mxu0 %v184
    %v257 = vpop.f32.mrf.mxu0
    %v258 = vadd.f32 %v177, %v257
    %v259 = vpop.f32.mrf.mxu0
    %260 = vdwg.mxu0
    %v261 = vld [vmem:[#allocation9] sm:$0x1]
    %v262 = vlaneseq
    %v263 = vshrl.u32 %v262, 7
    %v264 = vsub.s32 0, %v263
    %v265 = vrot.slane %v261, %v264
    %v266 = vadd.f32 %v253, %v265
    %v267 = vadd.f32 %v258, %v265
    %v268 = vsel %vm98, %v266, 0.0
    %269 = vadd.xlane.f32.xlu0 %v268
    %v270 = vpop.xlane.xlu0 %269
    %v271 = vsel %vm98, %v267, 0.0
    %272 = vadd.xlane.f32.xlu0 %v271
    %v273 = vpop.xlane.xlu0 %272
    %v274 = vrcp.pop 32.0
    %v275 = vmul.f32 %v270, %v274
    %v276 = vmul.f32 %v273, %v274
    %v277 = vsub.f32 %v266, %v275
    %v278 = vsub.f32 %v267, %v276
    %v279 = vmul.f32 %v277, %v277
    %v280 = vmul.f32 %v278, %v278
    %v281 = vsel %vm98, %v279, 0.0
    %282 = vadd.xlane.f32.xlu0 %v281
    %v283 = vpop.xlane.xlu0 %282
    %v284 = vsel %vm98, %v280, 0.0
    %285 = vadd.xlane.f32.xlu0 %v284
    %v286 = vpop.xlane.xlu0 %285
    %v287 = vmul.f32 %v283, %v274
    %v288 = vmul.f32 %v286, %v274
    %v289 = vadd.f32 %v287, 1e-05
    %v290 = vadd.f32 %v288, 1e-05
    %v291 = vrsqrt.pop %v289
    %v292 = vrsqrt.pop %v290
    %v293 = vmul.f32 %v277, %v291
    %v294 = vmul.f32 %v278, %v292
    %v295 = vld [vmem:[#allocation9 + $0x1] sm:$0x1]
    %v296 = vlaneseq
    %v297 = vshrl.u32 %v296, 7
    %v298 = vsub.s32 0, %v297
    %v299 = vrot.slane %v295, %v298
    %v300 = vmul.f32 %v293, %v299
    %v301 = vmul.f32 %v294, %v299
    %v302 = vld [vmem:[#allocation9 + $0x2] sm:$0x1]
    %v303 = vlaneseq
    %v304 = vshrl.u32 %v303, 7
    %v305 = vsub.s32 0, %v304
    %v306 = vrot.slane %v302, %v305
    %v307 = vadd.f32 %v300, %v306
    %v308 = vadd.f32 %v301, %v306
    %v309 = vmax.f32 %v307, 0.0
    %v310 = vmax.f32 %v308, 0.0
    %v311 = vld [vmem:[#allocation9 + $0x3] sm:$0x1]
    %v312 = vlaneseq
    %v313 = vshrl.u32 %v312, 7
    %v314 = vsub.s32 0, %v313
    %v315 = vrot.slane %v311, %v314
    %v316 = vmul.f32 %v309, %v315
    %v317 = vmul.f32 %v310, %v315
    %v318 = vsel %vm98, %v316, 0.0
    %319 = vadd.xlane.f32.xlu0 %v318
    %v320 = vpop.xlane.xlu0 %319
    %v321 = vsel %vm98, %v317, 0.0
    %322 = vadd.xlane.f32.xlu0 %v321
    %v323 = vpop.xlane.xlu0 %322
    %v324 = vld [vmem:[#allocation9 + $0x4] sm:$0x1]
    %v325 = vlaneseq
    %v326 = vshrl.u32 %v325, 7
    %v327 = vsub.s32 0, %v326
    %v328 = vrot.slane %v324, %v327
    %v329 = vadd.f32 %v320, %v328
    %v330 = vadd.f32 %v323, %v328
    %vm331 = vcmask 7168
    %332 = vst.msk [vmem:[%s5] sm:$0xff] %vm331, %v329
    %333 = vst.msk [vmem:[%s5 + $0x8] sm:$0xff] %vm331, %v330
    // Predicated region
    $region42: #{tpu_custom_call.1} parent=1 // pred_check
      _
    $region43: #{tpu_custom_call.1} parent=1 // pred_check_branch
      %335 = sbr.rel (0) target = $region45
    $region44: #{tpu_custom_call.1} parent=1 // pred_region
      _
    $region45: #{tpu_custom_call.1} parent=1 // pred_fallthru
      _
    // Predicated region
    $region46: #{tpu_custom_call.1} parent=1 // pred_check
      _
    $region47: #{tpu_custom_call.1} parent=1 // pred_check_branch
      %337 = sbr.rel (0) target = $region49
    $region48: #{tpu_custom_call.1} parent=1 // pred_region
      _
    $region49: #{tpu_custom_call.1} parent=1 // pred_fallthru
      _
    %338 = vsyncpa [#allocation3], 1
    %339 = vsyncpa [#allocation5], 1
    %340 = vsyncpa [#allocation8], 1

</llo_original>
